<compile_context>
chip_gen: v7x
topology: tpu7x:2x2x1
jax: 0.10.0
libtpu: 0.0.40
codegen_flags: <defaults>
</compile_context>

<pallas_src>
import jax
import jax.numpy as jnp
from jax.experimental import pallas as pl
from jax.experimental.pallas import tpu as pltpu

K_IN = 28 * 28      # 784
K_PAD = 896         # 7 * 128 (zero-padded K of layer 1)
H1 = 128
H2 = 64
H2_PAD = 128        # layer-2 output padded to a full lane tile
N_OUT = 10
N_PAD = 128         # lane-dense output width
MAX_TILE_B = 512    # x tile (512, 896) bf16 ~ 0.9 MiB; x2 buffers + out tile < 3 MiB


def _round_up(n, m):
    return ((n + m - 1) // m) * m


def mlp_kernel(x_ref, w1_ref, b1_ref, w2_ref, b2_ref, w3_ref, b3_ref, o_ref):
    # All matmuls: bf16 operands, f32 accumulation on the MXU.
    x = x_ref[...]                                                     # (TB, 896) bf16
    h1 = jnp.dot(x, w1_ref[...], preferred_element_type=jnp.float32) + b1_ref[...]
    h1 = jnp.maximum(h1, 0.0).astype(jnp.bfloat16)                     # (TB, 128)
    h2 = jnp.dot(h1, w2_ref[...], preferred_element_type=jnp.float32) + b2_ref[...]
    h2 = jnp.maximum(h2, 0.0).astype(jnp.bfloat16)                     # (TB, 128); cols 64: are 0
    o_ref[...] = jnp.dot(h2, w3_ref[...], preferred_element_type=jnp.float32) + b3_ref[...]


@jax.jit
def neural_network_forward(x, params):
    """x: (B, 1, 28, 28) or (B, 784) float32. Returns (B, 10) logits (f32)."""
    w1, b1, w2, b2, w3, b3 = params
    x2d = x.reshape(-1, K_IN).astype(jnp.float32)
    B = x2d.shape[0]

    tile_b = min(MAX_TILE_B, _round_up(B, 8))
    b_pad = _round_up(B, tile_b)

    # Pack operands into padded, lane-dense layouts (zero padding preserves math).
    x_p = jnp.zeros((b_pad, K_PAD), jnp.bfloat16).at[:B, :K_IN].set(
        x2d.astype(jnp.bfloat16))
    w1_p = jnp.zeros((K_PAD, H1), jnp.bfloat16).at[:K_IN, :].set(w1.astype(jnp.bfloat16))
    b1_p = b1.reshape(1, H1).astype(jnp.float32)
    w2_p = jnp.zeros((H1, H2_PAD), jnp.bfloat16).at[:, :H2].set(w2.astype(jnp.bfloat16))
    b2_p = jnp.zeros((1, H2_PAD), jnp.float32).at[:, :H2].set(b2.reshape(1, H2))
    w3_p = jnp.zeros((H2_PAD, N_PAD), jnp.bfloat16).at[:H2, :N_OUT].set(
        w3.astype(jnp.bfloat16))
    b3_p = jnp.zeros((1, N_PAD), jnp.float32).at[:, :N_OUT].set(b3.reshape(1, N_OUT))

    grid = (b_pad // tile_b,)
    cost = pl.CostEstimate(
        flops=2 * b_pad * (K_PAD * H1 + H1 * H2_PAD + H2_PAD * N_PAD),
        transcendentals=0,
        bytes_accessed=(x_p.size * 2 + w1_p.size * 2 + w2_p.size * 2 + w3_p.size * 2
                        + (b1_p.size + b2_p.size + b3_p.size) * 4
                        + b_pad * N_PAD * 4),
    )

    out_padded = pl.pallas_call(
        mlp_kernel,
        out_shape=jax.ShapeDtypeStruct((b_pad, N_PAD), jnp.float32),
        grid_spec=pltpu.PrefetchScalarGridSpec(
            num_scalar_prefetch=0,
            grid=grid,
            in_specs=[
                pl.BlockSpec((tile_b, K_PAD), lambda i: (i, 0)),   # x: tiled over batch
                pl.BlockSpec((K_PAD, H1), lambda i: (0, 0)),       # weights stay resident
                pl.BlockSpec((1, H1), lambda i: (0, 0)),
                pl.BlockSpec((H1, H2_PAD), lambda i: (0, 0)),
                pl.BlockSpec((1, H2_PAD), lambda i: (0, 0)),
                pl.BlockSpec((H2_PAD, N_PAD), lambda i: (0, 0)),
                pl.BlockSpec((1, N_PAD), lambda i: (0, 0)),
            ],
            out_specs=pl.BlockSpec((tile_b, N_PAD), lambda i: (i, 0)),
        ),
        compiler_params=pltpu.CompilerParams(
            dimension_semantics=("parallel",),          # shard batch grid across TCs (v7x)
            vmem_limit_bytes=32 * 1024 * 1024,          # headroom under v7x's 64 MiB VMEM
        ),
        cost_estimate=cost,
    )(x_p, w1_p, b1_p, w2_p, b2_p, w3_p, b3_p)

    return out_padded[:B, :N_OUT]


def init_params(key):
    """Deterministic init matching nn.Linear's U(-1/sqrt(fan_in), 1/sqrt(fan_in))."""
    def linear(key, fan_in, fan_out):
        kw, kb = jax.random.split(key)
        bound = 1.0 / jnp.sqrt(fan_in)
        w = jax.random.uniform(kw, (fan_in, fan_out), jnp.float32, -bound, bound)
        b = jax.random.uniform(kb, (1, fan_out), jnp.float32, -bound, bound)
        return w, b

    k1, k2, k3 = jax.random.split(key, 3)
    w1, b1 = linear(k1, K_IN, H1)
    w2, b2 = linear(k2, H1, H2)
    w3, b3 = linear(k3, H2, N_OUT)
    return (w1, b1, w2, b2, w3, b3)


def reference_forward(x, params):
    w1, b1, w2, b2, w3, b3 = params
    x2d = x.reshape(-1, K_IN).astype(jnp.float32)
    h1 = jnp.maximum(x2d @ w1 + b1, 0.0)
    h2 = jnp.maximum(h1 @ w2 + b2, 0.0)
    return h2 @ w3 + b3


if __name__ == "__main__":
    key = jax.random.PRNGKey(0)
    kp, kx = jax.random.split(key)
    params = init_params(kp)
    x = jax.random.normal(kx, (8, 1, 28, 28), jnp.float32)  # small MNIST-like batch

    out = neural_network_forward(x, params)
    out = jax.block_until_ready(out)

    ref = reference_forward(x, params)
    assert out.shape == (8, 10), out.shape
    # bf16 matmul operands (f32 accumulation) -> loosened tolerance vs f32 reference.
    assert jnp.allclose(out, ref, atol=2e-2, rtol=2e-2), "mismatch vs reference"
    print("KERNEL_OK")
</pallas_src>

<mosaic_0001>
module attributes {stable_mosaic.version = 11 : i64} {
  func.func @mlp_kernel(%arg0: i32, %arg1: memref<8x896xbf16, #tpu.memory_space<vmem>>, %arg2: memref<896x128xbf16, #tpu.memory_space<vmem>>, %arg3: memref<1x128xf32, #tpu.memory_space<vmem>>, %arg4: memref<128x128xbf16, #tpu.memory_space<vmem>>, %arg5: memref<1x128xf32, #tpu.memory_space<vmem>>, %arg6: memref<128x128xbf16, #tpu.memory_space<vmem>>, %arg7: memref<1x128xf32, #tpu.memory_space<vmem>>, %arg8: memref<8x128xf32, #tpu.memory_space<vmem>>) attributes {dimension_semantics = [#tpu.dimension_semantics<parallel>], iteration_bounds = array<i64: 1>, scalar_prefetch = 0 : i64, scratch_operands = 0 : i64, tpu.core_type = #tpu.core_type<tc>, window_params = [{transform_indices = @transform_0, window_bounds = array<i64: 8, 896>}, {pipeline_mode = #tpu.pipeline_mode<synchronous>, transform_indices = @transform_1, window_bounds = array<i64: 896, 128>}, {pipeline_mode = #tpu.pipeline_mode<synchronous>, transform_indices = @transform_2, window_bounds = array<i64: 1, 128>}, {pipeline_mode = #tpu.pipeline_mode<synchronous>, transform_indices = @transform_3, window_bounds = array<i64: 128, 128>}, {pipeline_mode = #tpu.pipeline_mode<synchronous>, transform_indices = @transform_4, window_bounds = array<i64: 1, 128>}, {pipeline_mode = #tpu.pipeline_mode<synchronous>, transform_indices = @transform_5, window_bounds = array<i64: 128, 128>}, {pipeline_mode = #tpu.pipeline_mode<synchronous>, transform_indices = @transform_6, window_bounds = array<i64: 1, 128>}, {transform_indices = @transform_7, window_bounds = array<i64: 8, 128>}]} {
    %c0 = arith.constant 0 : index
    %c0_0 = arith.constant 0 : index
    %0 = vector.load %arg1[%c0, %c0_0] : memref<8x896xbf16, #tpu.memory_space<vmem>>, vector<8x896xbf16>
    %c0_1 = arith.constant 0 : index
    %c0_2 = arith.constant 0 : index
    %1 = vector.load %arg2[%c0_1, %c0_2] : memref<896x128xbf16, #tpu.memory_space<vmem>>, vector<896x128xbf16>
    %cst = arith.constant dense<0.000000e+00> : vector<8x128xf32>
    %2 = tpu.matmul %0, %1, %cst {dimension_numbers = #tpu.dot_dimension_numbers<[1], [0], [0], [1], [0, 0, 1, 1], [], []>} : vector<8x896xbf16>, vector<896x128xbf16>, vector<8x128xf32> -> vector<8x128xf32>
    %c0_3 = arith.constant 0 : index
    %c0_4 = arith.constant 0 : index
    %3 = vector.load %arg3[%c0_3, %c0_4] : memref<1x128xf32, #tpu.memory_space<vmem>>, vector<1x128xf32>
    %4 = vector.broadcast %3 : vector<1x128xf32> to vector<8x128xf32>
    %5 = arith.addf %2, %4 : vector<8x128xf32>
    %cst_5 = arith.constant 0.000000e+00 : f32
    %6 = vector.broadcast %cst_5 : f32 to vector<8x128xf32>
    %7 = arith.maximumf %5, %6 : vector<8x128xf32>
    %8 = arith.truncf %7 : vector<8x128xf32> to vector<8x128xbf16>
    %c0_6 = arith.constant 0 : index
    %c0_7 = arith.constant 0 : index
    %9 = vector.load %arg4[%c0_6, %c0_7] : memref<128x128xbf16, #tpu.memory_space<vmem>>, vector<128x128xbf16>
    %cst_8 = arith.constant dense<0.000000e+00> : vector<8x128xf32>
    %10 = tpu.matmul %8, %9, %cst_8 {dimension_numbers = #tpu.dot_dimension_numbers<[1], [0], [0], [1], [0, 0, 1, 1], [], []>} : vector<8x128xbf16>, vector<128x128xbf16>, vector<8x128xf32> -> vector<8x128xf32>
    %c0_9 = arith.constant 0 : index
    %c0_10 = arith.constant 0 : index
    %11 = vector.load %arg5[%c0_9, %c0_10] : memref<1x128xf32, #tpu.memory_space<vmem>>, vector<1x128xf32>
    %12 = vector.broadcast %11 : vector<1x128xf32> to vector<8x128xf32>
    %13 = arith.addf %10, %12 : vector<8x128xf32>
    %cst_11 = arith.constant 0.000000e+00 : f32
    %14 = vector.broadcast %cst_11 : f32 to vector<8x128xf32>
    %15 = arith.maximumf %13, %14 : vector<8x128xf32>
    %16 = arith.truncf %15 : vector<8x128xf32> to vector<8x128xbf16>
    %c0_12 = arith.constant 0 : index
    %c0_13 = arith.constant 0 : index
    %17 = vector.load %arg6[%c0_12, %c0_13] : memref<128x128xbf16, #tpu.memory_space<vmem>>, vector<128x128xbf16>
    %cst_14 = arith.constant dense<0.000000e+00> : vector<8x128xf32>
    %18 = tpu.matmul %16, %17, %cst_14 {dimension_numbers = #tpu.dot_dimension_numbers<[1], [0], [0], [1], [0, 0, 1, 1], [], []>} : vector<8x128xbf16>, vector<128x128xbf16>, vector<8x128xf32> -> vector<8x128xf32>
    %c0_15 = arith.constant 0 : index
    %c0_16 = arith.constant 0 : index
    %19 = vector.load %arg7[%c0_15, %c0_16] : memref<1x128xf32, #tpu.memory_space<vmem>>, vector<1x128xf32>
    %20 = vector.broadcast %19 : vector<1x128xf32> to vector<8x128xf32>
    %21 = arith.addf %18, %20 : vector<8x128xf32>
    %c0_17 = arith.constant 0 : index
    %c0_18 = arith.constant 0 : index
    %22 = vector.load %arg8[%c0_17, %c0_18] : memref<8x128xf32, #tpu.memory_space<vmem>>, vector<8x128xf32>
    tpu.vector_store %arg8[%c0_17, %c0_18], %21 {strides = array<i32>} : memref<8x128xf32, #tpu.memory_space<vmem>>, vector<8x128xf32>,
    return
  }
  func.func @transform_0(%arg0: i32) -> (i32, i32) {
    %c0_i32 = arith.constant 0 : i32
    %c0_i32_0 = arith.constant 0 : i32
    return %arg0, %c0_i32 : i32, i32
  }
  func.func @transform_1(%arg0: i32) -> (i32, i32) {
    %c0_i32 = arith.constant 0 : i32
    %c0_i32_0 = arith.constant 0 : i32
    %c0_i32_1 = arith.constant 0 : i32
    return %c0_i32, %c0_i32_0 : i32, i32
  }
  func.func @transform_2(%arg0: i32) -> (i32, i32) {
    %c0_i32 = arith.constant 0 : i32
    %c0_i32_0 = arith.constant 0 : i32
    %c0_i32_1 = arith.constant 0 : i32
    return %c0_i32, %c0_i32_0 : i32, i32
  }
  func.func @transform_3(%arg0: i32) -> (i32, i32) {
    %c0_i32 = arith.constant 0 : i32
    %c0_i32_0 = arith.constant 0 : i32
    %c0_i32_1 = arith.constant 0 : i32
    return %c0_i32, %c0_i32_0 : i32, i32
  }
  func.func @transform_4(%arg0: i32) -> (i32, i32) {
    %c0_i32 = arith.constant 0 : i32
    %c0_i32_0 = arith.constant 0 : i32
    %c0_i32_1 = arith.constant 0 : i32
    return %c0_i32, %c0_i32_0 : i32, i32
  }
  func.func @transform_5(%arg0: i32) -> (i32, i32) {
    %c0_i32 = arith.constant 0 : i32
    %c0_i32_0 = arith.constant 0 : i32
    %c0_i32_1 = arith.constant 0 : i32
    return %c0_i32, %c0_i32_0 : i32, i32
  }
  func.func @transform_6(%arg0: i32) -> (i32, i32) {
    %c0_i32 = arith.constant 0 : i32
    %c0_i32_0 = arith.constant 0 : i32
    %c0_i32_1 = arith.constant 0 : i32
    return %c0_i32, %c0_i32_0 : i32, i32
  }
  func.func @transform_7(%arg0: i32) -> (i32, i32) {
    %c0_i32 = arith.constant 0 : i32
    %c0_i32_0 = arith.constant 0 : i32
    return %arg0, %c0_i32 : i32, i32
  }
}

</mosaic_0001>

<llo_original>
// kernel: neural_network_forward.1
$region0: #{neural_network_forward.1}
  #allocation0 [shape = 'u32[]', space=smem, size = 0x4, offset = 0x4, fixed_abs, tag = 'smem constant byte address 0x4 - core index']
  #allocation1 [shape = 'u32[144,128]{1,0:T(1,128)}', space=vmem, size = 0x12000, scoped, tag = 'internal scratch']
  %s0 = inlined_call_operand.vmem [shape: bf16[8,896], index: 0, kind: input, shape index: {}]
  %s1 = inlined_call_operand.vmem [shape: bf16[896,128], index: 1, kind: input, shape index: {}]
  %s2 = inlined_call_operand.vmem [shape: f32[1,128], index: 2, kind: input, shape index: {}]
  %s3 = inlined_call_operand.vmem [shape: bf16[128,128], index: 3, kind: input, shape index: {}]
  %s4 = inlined_call_operand.vmem [shape: f32[1,128], index: 4, kind: input, shape index: {}]
  %s5 = inlined_call_operand.vmem [shape: bf16[128,128], index: 5, kind: input, shape index: {}]
  %s6 = inlined_call_operand.vmem [shape: f32[1,128], index: 6, kind: input, shape index: {}]
  %s7 = inlined_call_operand.hbm [shape: f32[8,128], index: 7, kind: output, shape index: {}]
  %s8 = sld [smem:[#allocation0]]
  $region38: #{neural_network_forward.1} parent=0
    _
  %s10 = ssub.s32 1, %s8
  %s11 = scalar_select 0, %s10, %s8
  $region1: #{neural_network_forward.1} parent=0
    #allocation2 [shape = 'u8[4096]{0}', space=vmem, size = 0x1000, scoped, tag = 'output window, operand 0, single buffered']
    #allocation3 [shape = 's32[1]{0}', space=sflag, size = 0x4, scoped, tag = 'scoped memory for neural_network_forward.1']
    %12 = vsyncpa [#allocation3], 0
    // Predicated region
    $region2: #{neural_network_forward.1} parent=1 // pred_check
      _
    $region3: #{neural_network_forward.1} parent=1 // pred_check_branch
      %14 = sbr.rel (0) target = $region5
    $region4: #{neural_network_forward.1} parent=1 // pred_region
      _
    $region5: #{neural_network_forward.1} parent=1 // pred_fallthru
      _
    // Predicated region
    $region6: #{neural_network_forward.1} parent=1 // pred_check
      _
    $region7: #{neural_network_forward.1} parent=1 // pred_check_branch
      %16 = sbr.rel (0) target = $region9
    $region8: #{neural_network_forward.1} parent=1 // pred_region
      _
    $region9: #{neural_network_forward.1} parent=1 // pred_fallthru
      _
    // Predicated region
    $region10: #{neural_network_forward.1} parent=1 // pred_check
      _
    $region11: #{neural_network_forward.1} parent=1 // pred_check_branch
      %18 = sbr.rel (0) target = $region13
    $region12: #{neural_network_forward.1} parent=1 // pred_region
      _
    $region13: #{neural_network_forward.1} parent=1 // pred_fallthru
      _
    // Predicated region
    $region14: #{neural_network_forward.1} parent=1 // pred_check
      _
    $region15: #{neural_network_forward.1} parent=1 // pred_check_branch
      %20 = sbr.rel (0) target = $region17
    $region16: #{neural_network_forward.1} parent=1 // pred_region
      _
    $region17: #{neural_network_forward.1} parent=1 // pred_fallthru
      _
    // Predicated region
    $region18: #{neural_network_forward.1} parent=1 // pred_check
      _
    $region19: #{neural_network_forward.1} parent=1 // pred_check_branch
      %22 = sbr.rel (0) target = $region21
    $region20: #{neural_network_forward.1} parent=1 // pred_region
      _
    $region21: #{neural_network_forward.1} parent=1 // pred_fallthru
      _
    // Predicated region
    $region22: #{neural_network_forward.1} parent=1 // pred_check
      _
    $region23: #{neural_network_forward.1} parent=1 // pred_check_branch
      %24 = sbr.rel (0) target = $region25
    $region24: #{neural_network_forward.1} parent=1 // pred_region
      _
    $region25: #{neural_network_forward.1} parent=1 // pred_fallthru
      _
    // Predicated region
    $region26: #{neural_network_forward.1} parent=1 // pred_check
      _
    $region27: #{neural_network_forward.1} parent=1 // pred_check_branch
      %26 = sbr.rel (0) target = $region29
    $region28: #{neural_network_forward.1} parent=1 // pred_region
      _
    $region29: #{neural_network_forward.1} parent=1 // pred_fallthru
      _
    %v28 = vld [vmem:[%s0] sm:$0xff]
    %v29 = vld [vmem:[%s0 + $0x8] sm:$0xff]
    %v30 = vld [vmem:[%s0 + $0x10] sm:$0xff]
    %v31 = vld [vmem:[%s0 + $0x18] sm:$0xf]
    %v32 = vld [vmem:[%s1] sm:$0xf]
    %v33 = vld [vmem:[%s1 + $0x4] sm:$0xf]
    %v34 = vld [vmem:[%s1 + $0x8] sm:$0xf]
    %v35 = vld [vmem:[%s1 + $0xc] sm:$0xf]
    %v36 = vld [vmem:[%s1 + $0x10] sm:$0xf]
    %v37 = vld [vmem:[%s1 + $0x14] sm:$0xf]
    %v38 = vld [vmem:[%s1 + $0x18] sm:$0xf]
    %v39 = vld [vmem:[%s1 + $0x1c] sm:$0xf]
    %v40 = vld [vmem:[%s1 + $0x20] sm:$0xf]
    %v41 = vld [vmem:[%s1 + $0x24] sm:$0xf]
    %v42 = vld [vmem:[%s1 + $0x28] sm:$0xf]
    %v43 = vld [vmem:[%s1 + $0x2c] sm:$0xf]
    %v44 = vld [vmem:[%s1 + $0x30] sm:$0xf]
    %v45 = vld [vmem:[%s1 + $0x34] sm:$0xf]
    %v46 = vld [vmem:[%s1 + $0x38] sm:$0xf]
    %v47 = vld [vmem:[%s1 + $0x3c] sm:$0xf]
    %v48 = vld [vmem:[%s1 + $0x40] sm:$0xf]
    %v49 = vld [vmem:[%s1 + $0x44] sm:$0xf]
    %v50 = vld [vmem:[%s1 + $0x48] sm:$0xf]
    %v51 = vld [vmem:[%s1 + $0x4c] sm:$0xf]
    %v52 = vld [vmem:[%s1 + $0x50] sm:$0xf]
    %v53 = vld [vmem:[%s1 + $0x54] sm:$0xf]
    %v54 = vld [vmem:[%s1 + $0x58] sm:$0xf]
    %v55 = vld [vmem:[%s1 + $0x5c] sm:$0xf]
    %v56 = vld [vmem:[%s1 + $0x60] sm:$0xf]
    %v57 = vld [vmem:[%s1 + $0x64] sm:$0xf]
    %v58 = vld [vmem:[%s1 + $0x68] sm:$0xf]
    %v59 = vld [vmem:[%s1 + $0x6c] sm:$0xf]
    %v60 = vld [vmem:[%s1 + $0x70] sm:$0xf]
    %v61 = vld [vmem:[%s1 + $0x74] sm:$0xf]
    %v62 = vld [vmem:[%s1 + $0x78] sm:$0xf]
    %v63 = vld [vmem:[%s1 + $0x7c] sm:$0xf]
    %v64 = vld [vmem:[%s1 + $0x80] sm:$0xf]
    %v65 = vld [vmem:[%s1 + $0x84] sm:$0xf]
    %v66 = vld [vmem:[%s1 + $0x88] sm:$0xf]
    %v67 = vld [vmem:[%s1 + $0x8c] sm:$0xf]
    %v68 = vld [vmem:[%s1 + $0x90] sm:$0xf]
    %v69 = vld [vmem:[%s1 + $0x94] sm:$0xf]
    %v70 = vld [vmem:[%s1 + $0x98] sm:$0xf]
    %v71 = vld [vmem:[%s1 + $0x9c] sm:$0xf]
    %v72 = vld [vmem:[%s1 + $0xa0] sm:$0xf]
    %v73 = vld [vmem:[%s1 + $0xa4] sm:$0xf]
    %v74 = vld [vmem:[%s1 + $0xa8] sm:$0xf]
    %v75 = vld [vmem:[%s1 + $0xac] sm:$0xf]
    %v76 = vld [vmem:[%s1 + $0xb0] sm:$0xf]
    %v77 = vld [vmem:[%s1 + $0xb4] sm:$0xf]
    %v78 = vld [vmem:[%s1 + $0xb8] sm:$0xf]
    %v79 = vld [vmem:[%s1 + $0xbc] sm:$0xf]
    %v80 = vld [vmem:[%s1 + $0xc0] sm:$0xf]
    %v81 = vld [vmem:[%s1 + $0xc4] sm:$0xf]
    %v82 = vld [vmem:[%s1 + $0xc8] sm:$0xf]
    %v83 = vld [vmem:[%s1 + $0xcc] sm:$0xf]
    %v84 = vld [vmem:[%s1 + $0xd0] sm:$0xf]
    %v85 = vld [vmem:[%s1 + $0xd4] sm:$0xf]
    %v86 = vld [vmem:[%s1 + $0xd8] sm:$0xf]
    %v87 = vld [vmem:[%s1 + $0xdc] sm:$0xf]
    %v88 = vld [vmem:[%s1 + $0xe0] sm:$0xf]
    %v89 = vld [vmem:[%s1 + $0xe4] sm:$0xf]
    %v90 = vld [vmem:[%s1 + $0xe8] sm:$0xf]
    %v91 = vld [vmem:[%s1 + $0xec] sm:$0xf]
    %v92 = vld [vmem:[%s1 + $0xf0] sm:$0xf]
    %v93 = vld [vmem:[%s1 + $0xf4] sm:$0xf]
    %v94 = vld [vmem:[%s1 + $0xf8] sm:$0xf]
    %v95 = vld [vmem:[%s1 + $0xfc] sm:$0xf]
    %v96 = vld [vmem:[%s1 + $0x100] sm:$0xf]
    %v97 = vld [vmem:[%s1 + $0x104] sm:$0xf]
    %v98 = vld [vmem:[%s1 + $0x108] sm:$0xf]
    %v99 = vld [vmem:[%s1 + $0x10c] sm:$0xf]
    %v100 = vld [vmem:[%s1 + $0x110] sm:$0xf]
    %v101 = vld [vmem:[%s1 + $0x114] sm:$0xf]
    %v102 = vld [vmem:[%s1 + $0x118] sm:$0xf]
    %v103 = vld [vmem:[%s1 + $0x11c] sm:$0xf]
    %v104 = vld [vmem:[%s1 + $0x120] sm:$0xf]
    %v105 = vld [vmem:[%s1 + $0x124] sm:$0xf]
    %v106 = vld [vmem:[%s1 + $0x128] sm:$0xf]
    %v107 = vld [vmem:[%s1 + $0x12c] sm:$0xf]
    %v108 = vld [vmem:[%s1 + $0x130] sm:$0xf]
    %v109 = vld [vmem:[%s1 + $0x134] sm:$0xf]
    %v110 = vld [vmem:[%s1 + $0x138] sm:$0xf]
    %v111 = vld [vmem:[%s1 + $0x13c] sm:$0xf]
    %v112 = vld [vmem:[%s1 + $0x140] sm:$0xf]
    %v113 = vld [vmem:[%s1 + $0x144] sm:$0xf]
    %v114 = vld [vmem:[%s1 + $0x148] sm:$0xf]
    %v115 = vld [vmem:[%s1 + $0x14c] sm:$0xf]
    %v116 = vld [vmem:[%s1 + $0x150] sm:$0xf]
    %v117 = vld [vmem:[%s1 + $0x154] sm:$0xf]
    %v118 = vld [vmem:[%s1 + $0x158] sm:$0xf]
    %v119 = vld [vmem:[%s1 + $0x15c] sm:$0xf]
    %v120 = vld [vmem:[%s1 + $0x160] sm:$0xf]
    %v121 = vld [vmem:[%s1 + $0x164] sm:$0xf]
    %v122 = vld [vmem:[%s1 + $0x168] sm:$0xf]
    %v123 = vld [vmem:[%s1 + $0x16c] sm:$0xf]
    %v124 = vld [vmem:[%s1 + $0x170] sm:$0xf]
    %v125 = vld [vmem:[%s1 + $0x174] sm:$0xf]
    %v126 = vld [vmem:[%s1 + $0x178] sm:$0xf]
    %v127 = vld [vmem:[%s1 + $0x17c] sm:$0xf]
    %v128 = vld [vmem:[%s1 + $0x180] sm:$0xf]
    %v129 = vld [vmem:[%s1 + $0x184] sm:$0xf]
    %v130 = vld [vmem:[%s1 + $0x188] sm:$0xf]
    %v131 = vld [vmem:[%s1 + $0x18c] sm:$0xf]
    %v132 = vld [vmem:[%s1 + $0x190] sm:$0xf]
    %v133 = vld [vmem:[%s1 + $0x194] sm:$0xf]
    %v134 = vld [vmem:[%s1 + $0x198] sm:$0xf]
    %v135 = vld [vmem:[%s1 + $0x19c] sm:$0xf]
    %v136 = vld [vmem:[%s1 + $0x1a0] sm:$0xf]
    %v137 = vld [vmem:[%s1 + $0x1a4] sm:$0xf]
    %v138 = vld [vmem:[%s1 + $0x1a8] sm:$0xf]
    %v139 = vld [vmem:[%s1 + $0x1ac] sm:$0xf]
    %v140 = vld [vmem:[%s1 + $0x1b0] sm:$0xf]
    %v141 = vld [vmem:[%s1 + $0x1b4] sm:$0xf]
    %v142 = vld [vmem:[%s1 + $0x1b8] sm:$0xf]
    %v143 = vld [vmem:[%s1 + $0x1bc] sm:$0xf]
    %v144 = vld [vmem:[%s2] sm:$0x1]
    %v146 = vlaneseq
    %v147 = vshrl.u32 %v146, 7
    %v148 = vsub.s32 0, %v147
    %v149 = vrot.slane %v144, %v148
    %v155 = vunpack.c.l.b16 %v28
    %v156 = vunpack.c.h.b16 %v28
    %v157 = vunpack.c.l.b16 %v29
    %v158 = vunpack.c.h.b16 %v29
    %v159 = vunpack.c.l.b16 %v30
    %v160 = vunpack.c.h.b16 %v30
    %v161 = vunpack.c.l.b16 %v31
    %v162 = vpack.c.b16 %v155, %v155
    %v163 = vpack.c.b16 %v156, %v156
    %v164 = vpack.c.b16 %v157, %v157
    %v165 = vpack.c.b16 %v158, %v158
    %v166 = vpack.c.b16 %v159, %v159
    %v167 = vpack.c.b16 %v160, %v160
    %v168 = vpack.c.b16 %v161, %v161
    %v288 = vunpack.c.l.b16 %v32
    %v289 = vunpack.c.l.b16 %v33
    %v290 = vunpack.c.l.b16 %v34
    %v291 = vunpack.c.l.b16 %v35
    %v292 = vunpack.c.l.b16 %v36
    %v293 = vunpack.c.l.b16 %v37
    %v294 = vunpack.c.l.b16 %v38
    %v295 = vunpack.c.l.b16 %v39
    %v296 = vunpack.c.l.b16 %v40
    %v297 = vunpack.c.l.b16 %v41
    %v298 = vunpack.c.l.b16 %v42
    %v299 = vunpack.c.l.b16 %v43
    %v300 = vunpack.c.l.b16 %v44
    %v301 = vunpack.c.l.b16 %v45
    %v302 = vunpack.c.l.b16 %v46
    %v303 = vunpack.c.l.b16 %v47
    %v304 = vunpack.c.l.b16 %v48
    %v305 = vunpack.c.l.b16 %v49
    %v306 = vunpack.c.l.b16 %v50
    %v307 = vunpack.c.l.b16 %v51
    %v308 = vunpack.c.l.b16 %v52
    %v309 = vunpack.c.l.b16 %v53
    %v310 = vunpack.c.l.b16 %v54
    %v311 = vunpack.c.l.b16 %v55
    %v312 = vunpack.c.l.b16 %v56
    %v313 = vunpack.c.l.b16 %v57
    %v314 = vunpack.c.l.b16 %v58
    %v315 = vunpack.c.l.b16 %v59
    %v316 = vunpack.c.l.b16 %v60
    %v317 = vunpack.c.l.b16 %v61
    %v318 = vunpack.c.l.b16 %v62
    %v319 = vunpack.c.l.b16 %v63
    %v320 = vunpack.c.l.b16 %v64
    %v321 = vunpack.c.l.b16 %v65
    %v322 = vunpack.c.l.b16 %v66
    %v323 = vunpack.c.l.b16 %v67
    %v324 = vunpack.c.l.b16 %v68
    %v325 = vunpack.c.l.b16 %v69
    %v326 = vunpack.c.l.b16 %v70
    %v327 = vunpack.c.l.b16 %v71
    %v328 = vunpack.c.l.b16 %v72
    %v329 = vunpack.c.l.b16 %v73
    %v330 = vunpack.c.l.b16 %v74
    %v331 = vunpack.c.l.b16 %v75
    %v332 = vunpack.c.l.b16 %v76
    %v333 = vunpack.c.l.b16 %v77
    %v334 = vunpack.c.l.b16 %v78
    %v335 = vunpack.c.l.b16 %v79
    %v336 = vunpack.c.l.b16 %v80
    %v337 = vunpack.c.l.b16 %v81
    %v338 = vunpack.c.l.b16 %v82
    %v339 = vunpack.c.l.b16 %v83
    %v340 = vunpack.c.l.b16 %v84
    %v341 = vunpack.c.l.b16 %v85
    %v342 = vunpack.c.l.b16 %v86
    %v343 = vunpack.c.l.b16 %v87
    %v344 = vunpack.c.l.b16 %v88
    %v345 = vunpack.c.l.b16 %v89
    %v346 = vunpack.c.l.b16 %v90
    %v347 = vunpack.c.l.b16 %v91
    %v348 = vunpack.c.l.b16 %v92
    %v349 = vunpack.c.l.b16 %v93
    %v350 = vunpack.c.l.b16 %v94
    %v351 = vunpack.c.l.b16 %v95
    %v352 = vunpack.c.l.b16 %v96
    %v353 = vunpack.c.l.b16 %v97
    %v354 = vunpack.c.l.b16 %v98
    %v355 = vunpack.c.l.b16 %v99
    %v356 = vunpack.c.l.b16 %v100
    %v357 = vunpack.c.l.b16 %v101
    %v358 = vunpack.c.l.b16 %v102
    %v359 = vunpack.c.l.b16 %v103
    %v360 = vunpack.c.l.b16 %v104
    %v361 = vunpack.c.l.b16 %v105
    %v362 = vunpack.c.l.b16 %v106
    %v363 = vunpack.c.l.b16 %v107
    %v364 = vunpack.c.l.b16 %v108
    %v365 = vunpack.c.l.b16 %v109
    %v366 = vunpack.c.l.b16 %v110
    %v367 = vunpack.c.l.b16 %v111
    %v368 = vunpack.c.l.b16 %v112
    %v369 = vunpack.c.l.b16 %v113
    %v370 = vunpack.c.l.b16 %v114
    %v371 = vunpack.c.l.b16 %v115
    %v372 = vunpack.c.l.b16 %v116
    %v373 = vunpack.c.l.b16 %v117
    %v374 = vunpack.c.l.b16 %v118
    %v375 = vunpack.c.l.b16 %v119
    %v376 = vunpack.c.l.b16 %v120
    %v377 = vunpack.c.l.b16 %v121
    %v378 = vunpack.c.l.b16 %v122
    %v379 = vunpack.c.l.b16 %v123
    %v380 = vunpack.c.l.b16 %v124
    %v381 = vunpack.c.l.b16 %v125
    %v382 = vunpack.c.l.b16 %v126
    %v383 = vunpack.c.l.b16 %v127
    %v384 = vunpack.c.l.b16 %v128
    %v385 = vunpack.c.l.b16 %v129
    %v386 = vunpack.c.l.b16 %v130
    %v387 = vunpack.c.l.b16 %v131
    %v388 = vunpack.c.l.b16 %v132
    %v389 = vunpack.c.l.b16 %v133
    %v390 = vunpack.c.l.b16 %v134
    %v391 = vunpack.c.l.b16 %v135
    %v392 = vunpack.c.l.b16 %v136
    %v393 = vunpack.c.l.b16 %v137
    %v394 = vunpack.c.l.b16 %v138
    %v395 = vunpack.c.l.b16 %v139
    %v396 = vunpack.c.l.b16 %v140
    %v397 = vunpack.c.l.b16 %v141
    %v398 = vunpack.c.l.b16 %v142
    %v399 = vunpack.c.l.b16 %v143
    %v400 = vpack.c.b16 %v289, %v288
    %v401 = vpack.c.b16 %v291, %v290
    %v402 = vpack.c.b16 %v293, %v292
    %v403 = vpack.c.b16 %v295, %v294
    %v404 = vpack.c.b16 %v297, %v296
    %v405 = vpack.c.b16 %v299, %v298
    %v406 = vpack.c.b16 %v301, %v300
    %v407 = vpack.c.b16 %v303, %v302
    %v408 = vpack.c.b16 %v305, %v304
    %v409 = vpack.c.b16 %v307, %v306
    %v410 = vpack.c.b16 %v309, %v308
    %v411 = vpack.c.b16 %v311, %v310
    %v412 = vpack.c.b16 %v313, %v312
    %v413 = vpack.c.b16 %v315, %v314
    %v414 = vpack.c.b16 %v317, %v316
    %v415 = vpack.c.b16 %v319, %v318
    %v416 = vpack.c.b16 %v321, %v320
    %v417 = vpack.c.b16 %v323, %v322
    %v418 = vpack.c.b16 %v325, %v324
    %v419 = vpack.c.b16 %v327, %v326
    %v420 = vpack.c.b16 %v329, %v328
    %v421 = vpack.c.b16 %v331, %v330
    %v422 = vpack.c.b16 %v333, %v332
    %v423 = vpack.c.b16 %v335, %v334
    %v424 = vpack.c.b16 %v337, %v336
    %v425 = vpack.c.b16 %v339, %v338
    %v426 = vpack.c.b16 %v341, %v340
    %v427 = vpack.c.b16 %v343, %v342
    %v428 = vpack.c.b16 %v345, %v344
    %v429 = vpack.c.b16 %v347, %v346
    %v430 = vpack.c.b16 %v349, %v348
    %v431 = vpack.c.b16 %v351, %v350
    %v432 = vpack.c.b16 %v353, %v352
    %v433 = vpack.c.b16 %v355, %v354
    %v434 = vpack.c.b16 %v357, %v356
    %v435 = vpack.c.b16 %v359, %v358
    %v436 = vpack.c.b16 %v361, %v360
    %v437 = vpack.c.b16 %v363, %v362
    %v438 = vpack.c.b16 %v365, %v364
    %v439 = vpack.c.b16 %v367, %v366
    %v440 = vpack.c.b16 %v369, %v368
    %v441 = vpack.c.b16 %v371, %v370
    %v442 = vpack.c.b16 %v373, %v372
    %v443 = vpack.c.b16 %v375, %v374
    %v444 = vpack.c.b16 %v377, %v376
    %v445 = vpack.c.b16 %v379, %v378
    %v446 = vpack.c.b16 %v381, %v380
    %v447 = vpack.c.b16 %v383, %v382
    %v448 = vpack.c.b16 %v385, %v384
    %v449 = vpack.c.b16 %v387, %v386
    %v450 = vpack.c.b16 %v389, %v388
    %v451 = vpack.c.b16 %v391, %v390
    %v452 = vpack.c.b16 %v393, %v392
    %v453 = vpack.c.b16 %v395, %v394
    %v454 = vpack.c.b16 %v397, %v396
    %v455 = vpack.c.b16 %v399, %v398
    %512 = vmatprep.subr.bf16.mxu0 0
    %513 = vmatpush1.bf16.msra.mxu0 %v400
    %514 = vmatprep.subr.bf16.mxu0 0
    %515 = vmatpush1.bf16.msra.mxu0 %v401
    %516 = vmatprep.subr.bf16.mxu0 0
    %517 = vmatpush1.bf16.msra.mxu0 %v402
    %518 = vmatprep.subr.bf16.mxu0 0
    %519 = vmatpush1.bf16.msra.mxu0 %v403
    %520 = vmatprep.subr.bf16.mxu0 0
    %521 = vmatpush1.bf16.msra.mxu0 %v404
    %522 = vmatprep.subr.bf16.mxu0 0
    %523 = vmatpush1.bf16.msra.mxu0 %v405
    %524 = vmatprep.subr.bf16.mxu0 0
    %525 = vmatpush1.bf16.msra.mxu0 %v406
    %526 = vmatprep.subr.bf16.mxu0 0
    %527 = vmatpush1.bf16.msra.mxu0 %v407
    %528 = vmatprep.subr.bf16.mxu0 0
    %529 = vmatpush1.bf16.msra.mxu0 %v408
    %530 = vmatprep.subr.bf16.mxu0 0
    %531 = vmatpush1.bf16.msra.mxu0 %v409
    %532 = vmatprep.subr.bf16.mxu0 0
    %533 = vmatpush1.bf16.msra.mxu0 %v410
    %534 = vmatprep.subr.bf16.mxu0 0
    %535 = vmatpush1.bf16.msra.mxu0 %v411
    %536 = vmatprep.subr.bf16.mxu0 0
    %537 = vmatpush1.bf16.msra.mxu0 %v412
    %538 = vmatprep.subr.bf16.mxu0 0
    %539 = vmatpush1.bf16.msra.mxu0 %v413
    %540 = vmatprep.subr.bf16.mxu0 0
    %541 = vmatpush1.bf16.msra.mxu0 %v414
    %542 = vmatprep.subr.bf16.mxu0 0
    %543 = vmatpush1.bf16.msra.mxu0 %v415
    %544 = vmatprep.mubr.bf16.mxu0 %v163
    %545 = vmatmul.mubr.bf16.gmra.mrb[0].mxu0 %v162
    %v546 = vpop.f32.mrb[0].mxu0
    %v547 = vadd.f32 %v149, %v546
    %v548 = vpop.f32.mrb[0].mxu0
    %v549 = vpop.f32.mrb[0].mxu0
    %v550 = vpop.f32.mrb[0].mxu0
    %551 = vdwg.mxu0
    %552 = vmatprep.subr.bf16.mxu0 0
    %553 = vmatpush1.bf16.msra.mxu0 %v416
    %554 = vmatprep.subr.bf16.mxu0 0
    %555 = vmatpush1.bf16.msra.mxu0 %v417
    %556 = vmatprep.subr.bf16.mxu0 0
    %557 = vmatpush1.bf16.msra.mxu0 %v418
    %558 = vmatprep.subr.bf16.mxu0 0
    %559 = vmatpush1.bf16.msra.mxu0 %v419
    %560 = vmatprep.subr.bf16.mxu0 0
    %561 = vmatpush1.bf16.msra.mxu0 %v420
    %562 = vmatprep.subr.bf16.mxu0 0
    %563 = vmatpush1.bf16.msra.mxu0 %v421
    %564 = vmatprep.subr.bf16.mxu0 0
    %565 = vmatpush1.bf16.msra.mxu0 %v422
    %566 = vmatprep.subr.bf16.mxu0 0
    %567 = vmatpush1.bf16.msra.mxu0 %v423
    %568 = vmatprep.subr.bf16.mxu0 0
    %569 = vmatpush1.bf16.msra.mxu0 %v424
    %570 = vmatprep.subr.bf16.mxu0 0
    %571 = vmatpush1.bf16.msra.mxu0 %v425
    %572 = vmatprep.subr.bf16.mxu0 0
    %573 = vmatpush1.bf16.msra.mxu0 %v426
    %574 = vmatprep.subr.bf16.mxu0 0
    %575 = vmatpush1.bf16.msra.mxu0 %v427
    %576 = vmatprep.subr.bf16.mxu0 0
    %577 = vmatpush1.bf16.msra.mxu0 %v428
    %578 = vmatprep.subr.bf16.mxu0 0
    %579 = vmatpush1.bf16.msra.mxu0 %v429
    %580 = vmatprep.subr.bf16.mxu0 0
    %581 = vmatpush1.bf16.msra.mxu0 %v430
    %582 = vmatprep.subr.bf16.mxu0 0
    %583 = vmatpush1.bf16.msra.mxu0 %v431
    %584 = vmatprep.mubr.bf16.mxu0 %v165
    %585 = vmatmul.mubr.bf16.gmra.mrb[0].mxu0 %v164
    %v586 = vpop.f32.mrb[0].mxu0
    %v587 = vadd.f32 %v547, %v586
    %v588 = vpop.f32.mrb[0].mxu0
    %v589 = vpop.f32.mrb[0].mxu0
    %v590 = vpop.f32.mrb[0].mxu0
    %591 = vdwg.mxu0
    %592 = vmatprep.subr.bf16.mxu0 0
    %593 = vmatpush1.bf16.msra.mxu0 %v432
    %594 = vmatprep.subr.bf16.mxu0 0
    %595 = vmatpush1.bf16.msra.mxu0 %v433
    %596 = vmatprep.subr.bf16.mxu0 0
    %597 = vmatpush1.bf16.msra.mxu0 %v434
    %598 = vmatprep.subr.bf16.mxu0 0
    %599 = vmatpush1.bf16.msra.mxu0 %v435
    %600 = vmatprep.subr.bf16.mxu0 0
    %601 = vmatpush1.bf16.msra.mxu0 %v436
    %602 = vmatprep.subr.bf16.mxu0 0
    %603 = vmatpush1.bf16.msra.mxu0 %v437
    %604 = vmatprep.subr.bf16.mxu0 0
    %605 = vmatpush1.bf16.msra.mxu0 %v438
    %606 = vmatprep.subr.bf16.mxu0 0
    %607 = vmatpush1.bf16.msra.mxu0 %v439
    %608 = vmatprep.subr.bf16.mxu0 0
    %609 = vmatpush1.bf16.msra.mxu0 %v440
    %610 = vmatprep.subr.bf16.mxu0 0
    %611 = vmatpush1.bf16.msra.mxu0 %v441
    %612 = vmatprep.subr.bf16.mxu0 0
    %613 = vmatpush1.bf16.msra.mxu0 %v442
    %614 = vmatprep.subr.bf16.mxu0 0
    %615 = vmatpush1.bf16.msra.mxu0 %v443
    %616 = vmatprep.subr.bf16.mxu0 0
    %617 = vmatpush1.bf16.msra.mxu0 %v444
    %618 = vmatprep.subr.bf16.mxu0 0
    %619 = vmatpush1.bf16.msra.mxu0 %v445
    %620 = vmatprep.subr.bf16.mxu0 0
    %621 = vmatpush1.bf16.msra.mxu0 %v446
    %622 = vmatprep.subr.bf16.mxu0 0
    %623 = vmatpush1.bf16.msra.mxu0 %v447
    %624 = vmatprep.mubr.bf16.mxu0 %v167
    %625 = vmatmul.mubr.bf16.gmra.mrb[0].mxu0 %v166
    %v626 = vpop.f32.mrb[0].mxu0
    %v627 = vadd.f32 %v587, %v626
    %v628 = vpop.f32.mrb[0].mxu0
    %v629 = vpop.f32.mrb[0].mxu0
    %v630 = vpop.f32.mrb[0].mxu0
    %631 = vdwg.mxu0
    %632 = vmatprep.subr.bf16.mxu0 0
    %633 = vmatpush1.bf16.msra.mxu0 %v448
    %634 = vmatprep.subr.bf16.mxu0 0
    %635 = vmatpush1.bf16.msra.mxu0 %v449
    %636 = vmatprep.subr.bf16.mxu0 0
    %637 = vmatpush1.bf16.msra.mxu0 %v450
    %638 = vmatprep.subr.bf16.mxu0 0
    %639 = vmatpush1.bf16.msra.mxu0 %v451
    %640 = vmatprep.subr.bf16.mxu0 0
    %641 = vmatpush1.bf16.msra.mxu0 %v452
    %642 = vmatprep.subr.bf16.mxu0 0
    %643 = vmatpush1.bf16.msra.mxu0 %v453
    %644 = vmatprep.subr.bf16.mxu0 0
    %645 = vmatpush1.bf16.msra.mxu0 %v454
    %646 = vmatprep.subr.bf16.mxu0 0
    %647 = vmatpush1.bf16.msra.mxu0 %v455
    %648 = vmatprep.subr.bf16.mxu0 0
    %649 = vmatpush1.bf16.msra.mxu0 0
    %650 = vmatprep.subr.bf16.mxu0 0
    %651 = vmatpush1.bf16.msra.mxu0 0
    %652 = vmatprep.subr.bf16.mxu0 0
    %653 = vmatpush1.bf16.msra.mxu0 0
    %654 = vmatprep.subr.bf16.mxu0 0
    %655 = vmatpush1.bf16.msra.mxu0 0
    %656 = vmatprep.subr.bf16.mxu0 0
    %657 = vmatpush1.bf16.msra.mxu0 0
    %658 = vmatprep.subr.bf16.mxu0 0
    %659 = vmatpush1.bf16.msra.mxu0 0
    %660 = vmatprep.subr.bf16.mxu0 0
    %661 = vmatpush1.bf16.msra.mxu0 0
    %662 = vmatprep.subr.bf16.mxu0 0
    %663 = vmatpush1.bf16.msra.mxu0 0
    %664 = vmatprep.mubr.bf16.mxu0 0
    %665 = vmatmul.mubr.bf16.gmra.mrb[0].mxu0 %v168
    %v666 = vpop.f32.mrb[0].mxu0
    %v667 = vadd.f32 %v627, %v666
    %v668 = vpop.f32.mrb[0].mxu0
    %v669 = vpop.f32.mrb[0].mxu0
    %v670 = vpop.f32.mrb[0].mxu0
    %671 = vdwg.mxu0
    %v672 = vmax.f32 %v667, 0.0
    %v673 = vpack.c.bf16 %v672, %v672
    %v674 = vld [vmem:[%s3] sm:$0xf]
    %v675 = vld [vmem:[%s3 + $0x4] sm:$0xf]
    %v676 = vld [vmem:[%s3 + $0x8] sm:$0xf]
    %v677 = vld [vmem:[%s3 + $0xc] sm:$0xf]
    %v678 = vld [vmem:[%s3 + $0x10] sm:$0xf]
    %v679 = vld [vmem:[%s3 + $0x14] sm:$0xf]
    %v680 = vld [vmem:[%s3 + $0x18] sm:$0xf]
    %v681 = vld [vmem:[%s3 + $0x1c] sm:$0xf]
    %v682 = vld [vmem:[%s3 + $0x20] sm:$0xf]
    %v683 = vld [vmem:[%s3 + $0x24] sm:$0xf]
    %v684 = vld [vmem:[%s3 + $0x28] sm:$0xf]
    %v685 = vld [vmem:[%s3 + $0x2c] sm:$0xf]
    %v686 = vld [vmem:[%s3 + $0x30] sm:$0xf]
    %v687 = vld [vmem:[%s3 + $0x34] sm:$0xf]
    %v688 = vld [vmem:[%s3 + $0x38] sm:$0xf]
    %v689 = vld [vmem:[%s3 + $0x3c] sm:$0xf]
    %v690 = vld [vmem:[%s4] sm:$0x1]
    %v692 = vlaneseq
    %v693 = vshrl.u32 %v692, 7
    %v694 = vsub.s32 0, %v693
    %v695 = vrot.slane %v690, %v694
    %v713 = vunpack.c.l.b16 %v674
    %v714 = vunpack.c.l.b16 %v675
    %v715 = vunpack.c.l.b16 %v676
    %v716 = vunpack.c.l.b16 %v677
    %v717 = vunpack.c.l.b16 %v678
    %v718 = vunpack.c.l.b16 %v679
    %v719 = vunpack.c.l.b16 %v680
    %v720 = vunpack.c.l.b16 %v681
    %v721 = vunpack.c.l.b16 %v682
    %v722 = vunpack.c.l.b16 %v683
    %v723 = vunpack.c.l.b16 %v684
    %v724 = vunpack.c.l.b16 %v685
    %v725 = vunpack.c.l.b16 %v686
    %v726 = vunpack.c.l.b16 %v687
    %v727 = vunpack.c.l.b16 %v688
    %v728 = vunpack.c.l.b16 %v689
    %v729 = vpack.c.b16 %v714, %v713
    %v730 = vpack.c.b16 %v716, %v715
    %v731 = vpack.c.b16 %v718, %v717
    %v732 = vpack.c.b16 %v720, %v719
    %v733 = vpack.c.b16 %v722, %v721
    %v734 = vpack.c.b16 %v724, %v723
    %v735 = vpack.c.b16 %v726, %v725
    %v736 = vpack.c.b16 %v728, %v727
    %745 = vmatprep.subr.bf16.mxu0 0
    %746 = vmatpush1.bf16.msra.mxu0 %v729
    %747 = vmatprep.subr.bf16.mxu0 0
    %748 = vmatpush1.bf16.msra.mxu0 %v730
    %749 = vmatprep.subr.bf16.mxu0 0
    %750 = vmatpush1.bf16.msra.mxu0 %v731
    %751 = vmatprep.subr.bf16.mxu0 0
    %752 = vmatpush1.bf16.msra.mxu0 %v732
    %753 = vmatprep.subr.bf16.mxu0 0
    %754 = vmatpush1.bf16.msra.mxu0 %v733
    %755 = vmatprep.subr.bf16.mxu0 0
    %756 = vmatpush1.bf16.msra.mxu0 %v734
    %757 = vmatprep.subr.bf16.mxu0 0
    %758 = vmatpush1.bf16.msra.mxu0 %v735
    %759 = vmatprep.subr.bf16.mxu0 0
    %760 = vmatpush1.bf16.msra.mxu0 %v736
    %761 = vmatprep.subr.bf16.mxu0 0
    %762 = vmatpush1.bf16.msra.mxu0 0
    %763 = vmatprep.subr.bf16.mxu0 0
    %764 = vmatpush1.bf16.msra.mxu0 0
    %765 = vmatprep.subr.bf16.mxu0 0
    %766 = vmatpush1.bf16.msra.mxu0 0
    %767 = vmatprep.subr.bf16.mxu0 0
    %768 = vmatpush1.bf16.msra.mxu0 0
    %769 = vmatprep.subr.bf16.mxu0 0
    %770 = vmatpush1.bf16.msra.mxu0 0
    %771 = vmatprep.subr.bf16.mxu0 0
    %772 = vmatpush1.bf16.msra.mxu0 0
    %773 = vmatprep.subr.bf16.mxu0 0
    %774 = vmatpush1.bf16.msra.mxu0 0
    %775 = vmatprep.subr.bf16.mxu0 0
    %776 = vmatpush1.bf16.msra.mxu0 0
    %777 = vmatprep.mubr.bf16.mxu0 0
    %778 = vmatmul.mubr.bf16.gmra.mrb[0].mxu0 %v673
    %v779 = vpop.f32.mrb[0].mxu0
    %v780 = vadd.f32 %v695, %v779
    %v781 = vpop.f32.mrb[0].mxu0
    %v782 = vpop.f32.mrb[0].mxu0
    %v783 = vpop.f32.mrb[0].mxu0
    %784 = vdwg.mxu0
    %v785 = vmax.f32 %v780, 0.0
    %v786 = vpack.c.bf16 %v785, %v785
    %v787 = vld [vmem:[%s5] sm:$0xf]
    %v788 = vld [vmem:[%s5 + $0x4] sm:$0xf]
    %v789 = vld [vmem:[%s5 + $0x8] sm:$0xf]
    %v790 = vld [vmem:[%s5 + $0xc] sm:$0xf]
    %v791 = vld [vmem:[%s5 + $0x10] sm:$0xf]
    %v792 = vld [vmem:[%s5 + $0x14] sm:$0xf]
    %v793 = vld [vmem:[%s5 + $0x18] sm:$0xf]
    %v794 = vld [vmem:[%s5 + $0x1c] sm:$0xf]
    %v795 = vld [vmem:[%s5 + $0x20] sm:$0xf]
    %v796 = vld [vmem:[%s5 + $0x24] sm:$0xf]
    %v797 = vld [vmem:[%s5 + $0x28] sm:$0xf]
    %v798 = vld [vmem:[%s5 + $0x2c] sm:$0xf]
    %v799 = vld [vmem:[%s5 + $0x30] sm:$0xf]
    %v800 = vld [vmem:[%s5 + $0x34] sm:$0xf]
    %v801 = vld [vmem:[%s5 + $0x38] sm:$0xf]
    %v802 = vld [vmem:[%s5 + $0x3c] sm:$0xf]
    %v803 = vld [vmem:[%s6] sm:$0x1]
    %v805 = vlaneseq
    %v806 = vshrl.u32 %v805, 7
    %v807 = vsub.s32 0, %v806
    %v808 = vrot.slane %v803, %v807
    %v826 = vunpack.c.l.b16 %v787
    %v827 = vunpack.c.l.b16 %v788
    %v828 = vunpack.c.l.b16 %v789
    %v829 = vunpack.c.l.b16 %v790
    %v830 = vunpack.c.l.b16 %v791
    %v831 = vunpack.c.l.b16 %v792
    %v832 = vunpack.c.l.b16 %v793
    %v833 = vunpack.c.l.b16 %v794
    %v834 = vunpack.c.l.b16 %v795
    %v835 = vunpack.c.l.b16 %v796
    %v836 = vunpack.c.l.b16 %v797
    %v837 = vunpack.c.l.b16 %v798
    %v838 = vunpack.c.l.b16 %v799
    %v839 = vunpack.c.l.b16 %v800
    %v840 = vunpack.c.l.b16 %v801
    %v841 = vunpack.c.l.b16 %v802
    %v842 = vpack.c.b16 %v827, %v826
    %v843 = vpack.c.b16 %v829, %v828
    %v844 = vpack.c.b16 %v831, %v830
    %v845 = vpack.c.b16 %v833, %v832
    %v846 = vpack.c.b16 %v835, %v834
    %v847 = vpack.c.b16 %v837, %v836
    %v848 = vpack.c.b16 %v839, %v838
    %v849 = vpack.c.b16 %v841, %v840
    %858 = vmatprep.subr.bf16.mxu0 0
    %859 = vmatpush1.bf16.msra.mxu0 %v842
    %860 = vmatprep.subr.bf16.mxu0 0
    %861 = vmatpush1.bf16.msra.mxu0 %v843
    %862 = vmatprep.subr.bf16.mxu0 0
    %863 = vmatpush1.bf16.msra.mxu0 %v844
    %864 = vmatprep.subr.bf16.mxu0 0
    %865 = vmatpush1.bf16.msra.mxu0 %v845
    %866 = vmatprep.subr.bf16.mxu0 0
    %867 = vmatpush1.bf16.msra.mxu0 %v846
    %868 = vmatprep.subr.bf16.mxu0 0
    %869 = vmatpush1.bf16.msra.mxu0 %v847
    %870 = vmatprep.subr.bf16.mxu0 0
    %871 = vmatpush1.bf16.msra.mxu0 %v848
    %872 = vmatprep.subr.bf16.mxu0 0
    %873 = vmatpush1.bf16.msra.mxu0 %v849
    %874 = vmatprep.subr.bf16.mxu0 0
    %875 = vmatpush1.bf16.msra.mxu0 0
    %876 = vmatprep.subr.bf16.mxu0 0
    %877 = vmatpush1.bf16.msra.mxu0 0
    %878 = vmatprep.subr.bf16.mxu0 0
    %879 = vmatpush1.bf16.msra.mxu0 0
    %880 = vmatprep.subr.bf16.mxu0 0
    %881 = vmatpush1.bf16.msra.mxu0 0
    %882 = vmatprep.subr.bf16.mxu0 0
    %883 = vmatpush1.bf16.msra.mxu0 0
    %884 = vmatprep.subr.bf16.mxu0 0
    %885 = vmatpush1.bf16.msra.mxu0 0
    %886 = vmatprep.subr.bf16.mxu0 0
    %887 = vmatpush1.bf16.msra.mxu0 0
    %888 = vmatprep.subr.bf16.mxu0 0
    %889 = vmatpush1.bf16.msra.mxu0 0
    %890 = vmatprep.mubr.bf16.mxu0 0
    %891 = vmatmul.mubr.bf16.gmra.mrb[0].mxu0 %v786
    %v892 = vpop.f32.mrb[0].mxu0
    %v893 = vadd.f32 %v808, %v892
    %v894 = vpop.f32.mrb[0].mxu0
    %v895 = vpop.f32.mrb[0].mxu0
    %v896 = vpop.f32.mrb[0].mxu0
    %897 = vdwg.mxu0
    %898 = vst [vmem:[#allocation2] sm:$0xff] %v893
    // Predicated region
    $region30: #{neural_network_forward.1} parent=1 // pred_check
      _
    $region31: #{neural_network_forward.1} parent=1 // pred_check_branch
      %900 = sbr.rel (0) target = $region33
    $region32: #{neural_network_forward.1} parent=1 // pred_region
      %s902 = ssub.s32 128, 128
      %903 = vsyncadd [#allocation3], %s902
      %s905 = sshll.u32 [#allocation2], 4
      %s906 = int_to_ptr.vmem [resolvable:$true] %s905
      %908 = dma.vmem_to_hbm [thread:$0]  %s906, 128, %s7, [#allocation3]
    $region33: #{neural_network_forward.1} parent=1 // pred_fallthru
      _
    // Predicated region
    $region34: #{neural_network_forward.1} parent=1 // pred_check
      _
    $region35: #{neural_network_forward.1} parent=1 // pred_check_branch
      %910 = sbr.rel (0) target = $region37
    $region36: #{neural_network_forward.1} parent=1 // pred_region
      %911 = dma.done [#allocation3], 128
    $region37: #{neural_network_forward.1} parent=1 // pred_fallthru
      _
    %912 = vsyncpa [#allocation3], 1

</llo_original>
